<compile_context>
chip_gen: v6e
topology: v6e:2x2x1
jax: 0.10.0
libtpu: 0.0.40
codegen_flags: <defaults>
</compile_context>

<pallas_src>
import numpy as np
import jax
import jax.numpy as jnp
from jax.experimental import pallas as pl
from jax.experimental.pallas import tpu as pltpu


def _haar_rec2_weights():
    # Deterministic stand-in for dct['rec2'] from 'wavelet_weights_c2.pkl':
    # the standard 2x2 Haar filter bank (LL, LH, HL, HH).
    # Conv2d weight shape is (out=4, in=1, kh=2, kw=2); flattened to (4, 4)
    # with k = kh * 2 + kw (matches the polyphase sub-image order below).
    w = np.array(
        [[[0.5, 0.5], [0.5, 0.5]],      # LL  (approximation / "data")
         [[0.5, 0.5], [-0.5, -0.5]],    # LH
         [[0.5, -0.5], [0.5, -0.5]],    # HL
         [[0.5, -0.5], [-0.5, 0.5]]],   # HH
        dtype=np.float32)
    return jnp.asarray(w.reshape(4, 4))


def _reduce2d(a, op):
    # lane reduction then sublane reduction -> (1, 1) tile (avoids rank-0)
    return op(op(a, axis=-1, keepdims=True), axis=-2, keepdims=True)


def _wavelet_params_kernel(xs_ref, w_ref, mask_ref, ll_ref):
    # xs_ref : (1, 4, h, w) VMEM  -- the 4 polyphase sub-images of one batch item
    # w_ref  : (4, 4)       SMEM  -- flattened 2x2 conv weights, k = kh*2 + kw
    # mask_ref, ll_ref : (1, h, w) VMEM outputs
    s0 = xs_ref[0, 0]
    s1 = xs_ref[0, 1]
    s2 = xs_ref[0, 2]
    s3 = xs_ref[0, 3]
    h, w = s0.shape

    # Hoist the 16 SMEM scalar weight reads out of the per-channel expressions.
    # NOTE: if the weights are known to be the fixed Haar bank this collapses
    # to an 8-op butterfly; kept general to match the module's loaded weights.
    wv = [[w_ref[c, k] for k in range(4)] for c in range(4)]

    def chan(c):
        return ((wv[c][0] * s0 + wv[c][1] * s1) + wv[c][2] * s2) + wv[c][3] * s3

    ll = chan(0)                                     # low-low ("data") channel
    # |detail| channels, max over the 3 detail channels (torch.max over dim=1)
    detail = jnp.maximum(jnp.maximum(jnp.abs(chan(1)), jnp.abs(chan(2))),
                         jnp.abs(chan(3)))

    # per-image min / max, kept as (1, 1) tiles
    mn = _reduce2d(detail, jnp.min)
    mx = _reduce2d(detail, jnp.max)
    rng = mx - mn

    # Threshold search with the min/max normalization folded into absolute
    # thresholds:  norm <= t  <=>  detail <= mn + t * rng   (no divide, no
    # normalized temporary).  One lane-sum per threshold -> (h, 1) columns,
    # then a single combined sublane reduce yields all 10 counts.
    K = jnp.float32(0.85 * h * w)                    # 85% of the pixel count
    cols = []
    for j in range(10):
        t_j = jnp.float32(j + 1) * jnp.float32(0.1)
        cols.append(jnp.sum((detail <= mn + t_j * rng).astype(jnp.float32),
                            axis=-1, keepdims=True))            # (h, 1)
    counts = jnp.sum(jnp.concatenate(cols, axis=-1),
                     axis=-2, keepdims=True)                     # (1, 10)

    # counts are nondecreasing in j, so the smallest passing threshold is
    # t = 0.1 * (1 + number_of_failing_thresholds).
    nfail = jnp.sum((counts < K).astype(jnp.float32),
                    axis=-1, keepdims=True)                      # (1, 1)
    tsel = (nfail + 1.0) * jnp.float32(0.1)
    thr = mn + tsel * rng                                        # (1, 1)
    # TODO(synk): reference raises + np.save('error_disp.npy') when only the
    # t=1.0 bin reaches 85%; host-side file I/O / exception not reproduced.
    # (When mx == mn the reference produces NaNs and then raises; here the
    # folded thresholds give a well-defined all-ones mask instead.)

    mask_ref[0] = (detail >= thr).astype(jnp.float32)
    ll_ref[0] = ll


def _wavelet_level(x_nchw, w_flat):
    N, C, H, W = x_nchw.shape
    assert C == 1, "only groups=1 (single channel) path implemented"
    h, w = H // 2, W // 2

    # Polyphase split k = di*2 + dj with a single reshape + transpose (one XLA
    # transpose op; replaces 4 lane-strided slices + jnp.stack).
    xs = (x_nchw[:, 0]
          .reshape(N, h, 2, w, 2)
          .transpose(0, 2, 4, 1, 3)
          .reshape(N, 4, h, w))
    # NOTE: fully fusing this split into the kernel (strided sublane loads +
    # in-VMEM column deinterleave) would remove the remaining extra HBM pass.

    # Whole-image blocks; raise the scoped VMEM limit so larger images are not
    # rejected at the 16/32 MiB default.  Capped at 64 MiB (v7x physical VMEM).
    block_bytes = 4 * h * w * 4                       # one (1,4,h,w) f32 block
    est = 4 * block_bytes + 16 * h * w * 4            # dbl-buffered I/O + temps
    vmem_limit = int(min(64 * 2 ** 20, max(32 * 2 ** 20, est)))
    # NOTE: images beyond ~2K x 2K need spatial tiling (two-pass per-image
    # reduction for the threshold); whole-image-per-grid-step assumed here.

    mask, ll = pl.pallas_call(
        _wavelet_params_kernel,
        out_shape=(jax.ShapeDtypeStruct((N, h, w), jnp.float32),
                   jax.ShapeDtypeStruct((N, h, w), jnp.float32)),
        grid=(N,),
        in_specs=[pl.BlockSpec((1, 4, h, w), lambda n: (n, 0, 0, 0)),
                  pl.BlockSpec(memory_space=pltpu.MemorySpace.SMEM)],
        out_specs=(pl.BlockSpec((1, h, w), lambda n: (n, 0, 0)),
                   pl.BlockSpec((1, h, w), lambda n: (n, 0, 0))),
        compiler_params=pltpu.CompilerParams(
            dimension_semantics=("parallel",),
            vmem_limit_bytes=vmem_limit),
    )(xs, w_flat)
    return mask[:, None], ll[:, None]                 # back to (N, 1, h, w)


def _reference_level(x_nchw, w_flat):
    """Pure-JAX mirror of one wavelet level (same math/order as the kernel)."""
    N, C, H, W = x_nchw.shape
    h, w = H // 2, W // 2
    xs = (x_nchw[:, 0].reshape(N, h, 2, w, 2).transpose(0, 2, 4, 1, 3)
          .reshape(N, 4, h, w))

    def chan(c):
        return ((w_flat[c, 0] * xs[:, 0] + w_flat[c, 1] * xs[:, 1])
                + w_flat[c, 2] * xs[:, 2]) + w_flat[c, 3] * xs[:, 3]

    ll = chan(0)
    detail = jnp.maximum(jnp.maximum(jnp.abs(chan(1)), jnp.abs(chan(2))),
                         jnp.abs(chan(3)))
    mn = jnp.min(detail, axis=(1, 2), keepdims=True)
    mx = jnp.max(detail, axis=(1, 2), keepdims=True)
    rng = mx - mn
    K = jnp.float32(0.85 * h * w)
    counts = []
    for j in range(10):
        t_j = jnp.float32(j + 1) * jnp.float32(0.1)
        counts.append(jnp.sum((detail <= mn + t_j * rng).astype(jnp.float32),
                              axis=(1, 2)))
    counts = jnp.stack(counts, axis=-1)                          # (N, 10)
    nfail = jnp.sum((counts < K).astype(jnp.float32), axis=-1)   # (N,)
    tsel = ((nfail + 1.0) * jnp.float32(0.1))[:, None, None]
    mask = (detail >= mn + tsel * rng).astype(jnp.float32)
    return mask[:, None], ll[:, None]


def wavelet_params_forward(x, w_flat, scale=1):
    """JAX/Pallas equivalent of WaveletParams.forward (groups=1)."""
    # TODO(synk): groups=3 branch (per-RGB split + abs, no thresholding) not implemented.
    if x.ndim == 3:
        x = x[:, None]                                # unsqueeze(1)
    data = x
    output_list = []
    for _ in range(scale):
        mask, data = _wavelet_level(data, w_flat)
        output_list.append(mask)
    output_list.append(data)
    return output_list


if __name__ == "__main__":
    key = jax.random.PRNGKey(0)
    x = jax.random.normal(key, (2, 1, 16, 16), dtype=jnp.float32)
    w_flat = _haar_rec2_weights()

    outs = wavelet_params_forward(x, w_flat, scale=1)
    outs = jax.block_until_ready(outs)

    mask, data = outs
    assert mask.shape == (2, 1, 8, 8) and data.shape == (2, 1, 8, 8)
    assert mask.dtype == jnp.float32 and data.dtype == jnp.float32
    # mask must be binary
    assert bool(jnp.all((mask == 0.0) | (mask == 1.0)))

    # pure-JAX reference check (same math; allow a couple of boundary-pixel
    # flips in the binary mask from f32 rounding-order differences)
    ref_mask, ref_data = _reference_level(x, w_flat)
    assert bool(jnp.allclose(data, ref_data, atol=1e-5, rtol=1e-5))
    assert float(jnp.mean(jnp.abs(mask - ref_mask))) <= 0.05

    print("KERNEL_OK")
</pallas_src>

<mosaic_0001>
module attributes {stable_mosaic.version = 11 : i64} {
  func.func @_wavelet_params_kernel(%arg0: i32, %arg1: memref<1x4x8x8xf32, #tpu.memory_space<vmem>>, %arg2: memref<4x4xf32, #tpu.memory_space<smem>>, %arg3: memref<1x8x8xf32, #tpu.memory_space<vmem>>, %arg4: memref<1x8x8xf32, #tpu.memory_space<vmem>>) attributes {dimension_semantics = [#tpu.dimension_semantics<parallel>], iteration_bounds = array<i64: 2>, scalar_prefetch = 0 : i64, scratch_operands = 0 : i64, tpu.core_type = #tpu.core_type<tc>, window_params = [{transform_indices = @transform_0, window_bounds = array<i64: 1, 4, 8, 8>}, {transform_indices = @transform_1, window_bounds = array<i64: 4, 4>}, {transform_indices = @transform_2, window_bounds = array<i64: 1, 8, 8>}, {transform_indices = @transform_3, window_bounds = array<i64: 1, 8, 8>}]} {
    %c0 = arith.constant 0 : index
    %c0_0 = arith.constant 0 : index
    %c0_1 = arith.constant 0 : index
    %c0_2 = arith.constant 0 : index
    %0 = vector.load %arg1[%c0, %c0_0, %c0_1, %c0_2] : memref<1x4x8x8xf32, #tpu.memory_space<vmem>>, vector<1x1x8x8xf32>
    %1 = vector.shape_cast %0 : vector<1x1x8x8xf32> to vector<8x8xf32>
    %c0_3 = arith.constant 0 : index
    %c1 = arith.constant 1 : index
    %c0_4 = arith.constant 0 : index
    %c0_5 = arith.constant 0 : index
    %2 = vector.load %arg1[%c0_3, %c1, %c0_4, %c0_5] : memref<1x4x8x8xf32, #tpu.memory_space<vmem>>, vector<1x1x8x8xf32>
    %3 = vector.shape_cast %2 : vector<1x1x8x8xf32> to vector<8x8xf32>
    %c0_6 = arith.constant 0 : index
    %c2 = arith.constant 2 : index
    %c0_7 = arith.constant 0 : index
    %c0_8 = arith.constant 0 : index
    %4 = vector.load %arg1[%c0_6, %c2, %c0_7, %c0_8] : memref<1x4x8x8xf32, #tpu.memory_space<vmem>>, vector<1x1x8x8xf32>
    %5 = vector.shape_cast %4 : vector<1x1x8x8xf32> to vector<8x8xf32>
    %c0_9 = arith.constant 0 : index
    %c3 = arith.constant 3 : index
    %c0_10 = arith.constant 0 : index
    %c0_11 = arith.constant 0 : index
    %6 = vector.load %arg1[%c0_9, %c3, %c0_10, %c0_11] : memref<1x4x8x8xf32, #tpu.memory_space<vmem>>, vector<1x1x8x8xf32>
    %7 = vector.shape_cast %6 : vector<1x1x8x8xf32> to vector<8x8xf32>
    %c0_12 = arith.constant 0 : index
    %c0_13 = arith.constant 0 : index
    %8 = memref.load %arg2[%c0_12, %c0_13] : memref<4x4xf32, #tpu.memory_space<smem>>
    %c0_14 = arith.constant 0 : index
    %c1_15 = arith.constant 1 : index
    %9 = memref.load %arg2[%c0_14, %c1_15] : memref<4x4xf32, #tpu.memory_space<smem>>
    %c0_16 = arith.constant 0 : index
    %c2_17 = arith.constant 2 : index
    %10 = memref.load %arg2[%c0_16, %c2_17] : memref<4x4xf32, #tpu.memory_space<smem>>
    %c0_18 = arith.constant 0 : index
    %c3_19 = arith.constant 3 : index
    %11 = memref.load %arg2[%c0_18, %c3_19] : memref<4x4xf32, #tpu.memory_space<smem>>
    %c1_20 = arith.constant 1 : index
    %c0_21 = arith.constant 0 : index
    %12 = memref.load %arg2[%c1_20, %c0_21] : memref<4x4xf32, #tpu.memory_space<smem>>
    %c1_22 = arith.constant 1 : index
    %c1_23 = arith.constant 1 : index
    %13 = memref.load %arg2[%c1_22, %c1_23] : memref<4x4xf32, #tpu.memory_space<smem>>
    %c1_24 = arith.constant 1 : index
    %c2_25 = arith.constant 2 : index
    %14 = memref.load %arg2[%c1_24, %c2_25] : memref<4x4xf32, #tpu.memory_space<smem>>
    %c1_26 = arith.constant 1 : index
    %c3_27 = arith.constant 3 : index
    %15 = memref.load %arg2[%c1_26, %c3_27] : memref<4x4xf32, #tpu.memory_space<smem>>
    %c2_28 = arith.constant 2 : index
    %c0_29 = arith.constant 0 : index
    %16 = memref.load %arg2[%c2_28, %c0_29] : memref<4x4xf32, #tpu.memory_space<smem>>
    %c2_30 = arith.constant 2 : index
    %c1_31 = arith.constant 1 : index
    %17 = memref.load %arg2[%c2_30, %c1_31] : memref<4x4xf32, #tpu.memory_space<smem>>
    %c2_32 = arith.constant 2 : index
    %c2_33 = arith.constant 2 : index
    %18 = memref.load %arg2[%c2_32, %c2_33] : memref<4x4xf32, #tpu.memory_space<smem>>
    %c2_34 = arith.constant 2 : index
    %c3_35 = arith.constant 3 : index
    %19 = memref.load %arg2[%c2_34, %c3_35] : memref<4x4xf32, #tpu.memory_space<smem>>
    %c3_36 = arith.constant 3 : index
    %c0_37 = arith.constant 0 : index
    %20 = memref.load %arg2[%c3_36, %c0_37] : memref<4x4xf32, #tpu.memory_space<smem>>
    %c3_38 = arith.constant 3 : index
    %c1_39 = arith.constant 1 : index
    %21 = memref.load %arg2[%c3_38, %c1_39] : memref<4x4xf32, #tpu.memory_space<smem>>
    %c3_40 = arith.constant 3 : index
    %c2_41 = arith.constant 2 : index
    %22 = memref.load %arg2[%c3_40, %c2_41] : memref<4x4xf32, #tpu.memory_space<smem>>
    %c3_42 = arith.constant 3 : index
    %c3_43 = arith.constant 3 : index
    %23 = memref.load %arg2[%c3_42, %c3_43] : memref<4x4xf32, #tpu.memory_space<smem>>
    %24 = vector.broadcast %8 : f32 to vector<8x8xf32>
    %25 = arith.mulf %24, %1 : vector<8x8xf32>
    %26 = vector.broadcast %9 : f32 to vector<8x8xf32>
    %27 = arith.mulf %26, %3 : vector<8x8xf32>
    %28 = arith.addf %25, %27 : vector<8x8xf32>
    %29 = vector.broadcast %10 : f32 to vector<8x8xf32>
    %30 = arith.mulf %29, %5 : vector<8x8xf32>
    %31 = arith.addf %28, %30 : vector<8x8xf32>
    %32 = vector.broadcast %11 : f32 to vector<8x8xf32>
    %33 = arith.mulf %32, %7 : vector<8x8xf32>
    %34 = arith.addf %31, %33 : vector<8x8xf32>
    %35 = vector.broadcast %12 : f32 to vector<8x8xf32>
    %36 = arith.mulf %35, %1 : vector<8x8xf32>
    %37 = vector.broadcast %13 : f32 to vector<8x8xf32>
    %38 = arith.mulf %37, %3 : vector<8x8xf32>
    %39 = arith.addf %36, %38 : vector<8x8xf32>
    %40 = vector.broadcast %14 : f32 to vector<8x8xf32>
    %41 = arith.mulf %40, %5 : vector<8x8xf32>
    %42 = arith.addf %39, %41 : vector<8x8xf32>
    %43 = vector.broadcast %15 : f32 to vector<8x8xf32>
    %44 = arith.mulf %43, %7 : vector<8x8xf32>
    %45 = arith.addf %42, %44 : vector<8x8xf32>
    %46 = math.absf %45 : vector<8x8xf32>
    %47 = vector.broadcast %16 : f32 to vector<8x8xf32>
    %48 = arith.mulf %47, %1 : vector<8x8xf32>
    %49 = vector.broadcast %17 : f32 to vector<8x8xf32>
    %50 = arith.mulf %49, %3 : vector<8x8xf32>
    %51 = arith.addf %48, %50 : vector<8x8xf32>
    %52 = vector.broadcast %18 : f32 to vector<8x8xf32>
    %53 = arith.mulf %52, %5 : vector<8x8xf32>
    %54 = arith.addf %51, %53 : vector<8x8xf32>
    %55 = vector.broadcast %19 : f32 to vector<8x8xf32>
    %56 = arith.mulf %55, %7 : vector<8x8xf32>
    %57 = arith.addf %54, %56 : vector<8x8xf32>
    %58 = math.absf %57 : vector<8x8xf32>
    %59 = arith.maximumf %46, %58 : vector<8x8xf32>
    %60 = vector.broadcast %20 : f32 to vector<8x8xf32>
    %61 = arith.mulf %60, %1 : vector<8x8xf32>
    %62 = vector.broadcast %21 : f32 to vector<8x8xf32>
    %63 = arith.mulf %62, %3 : vector<8x8xf32>
    %64 = arith.addf %61, %63 : vector<8x8xf32>
    %65 = vector.broadcast %22 : f32 to vector<8x8xf32>
    %66 = arith.mulf %65, %5 : vector<8x8xf32>
    %67 = arith.addf %64, %66 : vector<8x8xf32>
    %68 = vector.broadcast %23 : f32 to vector<8x8xf32>
    %69 = arith.mulf %68, %7 : vector<8x8xf32>
    %70 = arith.addf %67, %69 : vector<8x8xf32>
    %71 = math.absf %70 : vector<8x8xf32>
    %72 = arith.maximumf %59, %71 : vector<8x8xf32>
    %cst = arith.constant dense<0x7F800000> : vector<8xf32>
    %73 = vector.multi_reduction <minimumf>, %72, %cst [1] : vector<8x8xf32> to vector<8xf32>
    %74 = vector.shape_cast %73 : vector<8xf32> to vector<8x1xf32>
    %cst_44 = arith.constant dense<0x7F800000> : vector<1xf32>
    %75 = vector.multi_reduction <minimumf>, %74, %cst_44 [0] : vector<8x1xf32> to vector<1xf32>
    %76 = vector.shape_cast %75 : vector<1xf32> to vector<1x1xf32>
    %cst_45 = arith.constant dense<0xFF800000> : vector<8xf32>
    %77 = vector.multi_reduction <maximumf>, %72, %cst_45 [1] : vector<8x8xf32> to vector<8xf32>
    %78 = vector.shape_cast %77 : vector<8xf32> to vector<8x1xf32>
    %cst_46 = arith.constant dense<0xFF800000> : vector<1xf32>
    %79 = vector.multi_reduction <maximumf>, %78, %cst_46 [0] : vector<8x1xf32> to vector<1xf32>
    %80 = vector.shape_cast %79 : vector<1xf32> to vector<1x1xf32>
    %81 = arith.subf %80, %76 : vector<1x1xf32>
    %cst_47 = arith.constant 1.000000e+00 : f32
    %cst_48 = arith.constant 1.000000e-01 : f32
    %82 = arith.mulf %cst_47, %cst_48 : f32
    %83 = vector.broadcast %82 : f32 to vector<1x1xf32>
    %84 = arith.mulf %83, %81 : vector<1x1xf32>
    %85 = arith.addf %76, %84 : vector<1x1xf32>
    %86 = vector.broadcast %85 : vector<1x1xf32> to vector<8x8xf32>
    %87 = arith.cmpf ole, %72, %86 : vector<8x8xf32>
    %88 = arith.extui %87 : vector<8x8xi1> to vector<8x8xi32>
    %89 = arith.sitofp %88 : vector<8x8xi32> to vector<8x8xf32>
    %cst_49 = arith.constant dense<0.000000e+00> : vector<8xf32>
    %90 = vector.multi_reduction <add>, %89, %cst_49 [1] : vector<8x8xf32> to vector<8xf32>
    %91 = vector.shape_cast %90 : vector<8xf32> to vector<8x1xf32>
    %cst_50 = arith.constant 2.000000e+00 : f32
    %cst_51 = arith.constant 1.000000e-01 : f32
    %92 = arith.mulf %cst_50, %cst_51 : f32
    %93 = vector.broadcast %92 : f32 to vector<1x1xf32>
    %94 = arith.mulf %93, %81 : vector<1x1xf32>
    %95 = arith.addf %76, %94 : vector<1x1xf32>
    %96 = vector.broadcast %95 : vector<1x1xf32> to vector<8x8xf32>
    %97 = arith.cmpf ole, %72, %96 : vector<8x8xf32>
    %98 = arith.extui %97 : vector<8x8xi1> to vector<8x8xi32>
    %99 = arith.sitofp %98 : vector<8x8xi32> to vector<8x8xf32>
    %cst_52 = arith.constant dense<0.000000e+00> : vector<8xf32>
    %100 = vector.multi_reduction <add>, %99, %cst_52 [1] : vector<8x8xf32> to vector<8xf32>
    %101 = vector.shape_cast %100 : vector<8xf32> to vector<8x1xf32>
    %cst_53 = arith.constant 3.000000e+00 : f32
    %cst_54 = arith.constant 1.000000e-01 : f32
    %102 = arith.mulf %cst_53, %cst_54 : f32
    %103 = vector.broadcast %102 : f32 to vector<1x1xf32>
    %104 = arith.mulf %103, %81 : vector<1x1xf32>
    %105 = arith.addf %76, %104 : vector<1x1xf32>
    %106 = vector.broadcast %105 : vector<1x1xf32> to vector<8x8xf32>
    %107 = arith.cmpf ole, %72, %106 : vector<8x8xf32>
    %108 = arith.extui %107 : vector<8x8xi1> to vector<8x8xi32>
    %109 = arith.sitofp %108 : vector<8x8xi32> to vector<8x8xf32>
    %cst_55 = arith.constant dense<0.000000e+00> : vector<8xf32>
    %110 = vector.multi_reduction <add>, %109, %cst_55 [1] : vector<8x8xf32> to vector<8xf32>
    %111 = vector.shape_cast %110 : vector<8xf32> to vector<8x1xf32>
    %cst_56 = arith.constant 4.000000e+00 : f32
    %cst_57 = arith.constant 1.000000e-01 : f32
    %112 = arith.mulf %cst_56, %cst_57 : f32
    %113 = vector.broadcast %112 : f32 to vector<1x1xf32>
    %114 = arith.mulf %113, %81 : vector<1x1xf32>
    %115 = arith.addf %76, %114 : vector<1x1xf32>
    %116 = vector.broadcast %115 : vector<1x1xf32> to vector<8x8xf32>
    %117 = arith.cmpf ole, %72, %116 : vector<8x8xf32>
    %118 = arith.extui %117 : vector<8x8xi1> to vector<8x8xi32>
    %119 = arith.sitofp %118 : vector<8x8xi32> to vector<8x8xf32>
    %cst_58 = arith.constant dense<0.000000e+00> : vector<8xf32>
    %120 = vector.multi_reduction <add>, %119, %cst_58 [1] : vector<8x8xf32> to vector<8xf32>
    %121 = vector.shape_cast %120 : vector<8xf32> to vector<8x1xf32>
    %cst_59 = arith.constant 5.000000e+00 : f32
    %cst_60 = arith.constant 1.000000e-01 : f32
    %122 = arith.mulf %cst_59, %cst_60 : f32
    %123 = vector.broadcast %122 : f32 to vector<1x1xf32>
    %124 = arith.mulf %123, %81 : vector<1x1xf32>
    %125 = arith.addf %76, %124 : vector<1x1xf32>
    %126 = vector.broadcast %125 : vector<1x1xf32> to vector<8x8xf32>
    %127 = arith.cmpf ole, %72, %126 : vector<8x8xf32>
    %128 = arith.extui %127 : vector<8x8xi1> to vector<8x8xi32>
    %129 = arith.sitofp %128 : vector<8x8xi32> to vector<8x8xf32>
    %cst_61 = arith.constant dense<0.000000e+00> : vector<8xf32>
    %130 = vector.multi_reduction <add>, %129, %cst_61 [1] : vector<8x8xf32> to vector<8xf32>
    %131 = vector.shape_cast %130 : vector<8xf32> to vector<8x1xf32>
    %cst_62 = arith.constant 6.000000e+00 : f32
    %cst_63 = arith.constant 1.000000e-01 : f32
    %132 = arith.mulf %cst_62, %cst_63 : f32
    %133 = vector.broadcast %132 : f32 to vector<1x1xf32>
    %134 = arith.mulf %133, %81 : vector<1x1xf32>
    %135 = arith.addf %76, %134 : vector<1x1xf32>
    %136 = vector.broadcast %135 : vector<1x1xf32> to vector<8x8xf32>
    %137 = arith.cmpf ole, %72, %136 : vector<8x8xf32>
    %138 = arith.extui %137 : vector<8x8xi1> to vector<8x8xi32>
    %139 = arith.sitofp %138 : vector<8x8xi32> to vector<8x8xf32>
    %cst_64 = arith.constant dense<0.000000e+00> : vector<8xf32>
    %140 = vector.multi_reduction <add>, %139, %cst_64 [1] : vector<8x8xf32> to vector<8xf32>
    %141 = vector.shape_cast %140 : vector<8xf32> to vector<8x1xf32>
    %cst_65 = arith.constant 7.000000e+00 : f32
    %cst_66 = arith.constant 1.000000e-01 : f32
    %142 = arith.mulf %cst_65, %cst_66 : f32
    %143 = vector.broadcast %142 : f32 to vector<1x1xf32>
    %144 = arith.mulf %143, %81 : vector<1x1xf32>
    %145 = arith.addf %76, %144 : vector<1x1xf32>
    %146 = vector.broadcast %145 : vector<1x1xf32> to vector<8x8xf32>
    %147 = arith.cmpf ole, %72, %146 : vector<8x8xf32>
    %148 = arith.extui %147 : vector<8x8xi1> to vector<8x8xi32>
    %149 = arith.sitofp %148 : vector<8x8xi32> to vector<8x8xf32>
    %cst_67 = arith.constant dense<0.000000e+00> : vector<8xf32>
    %150 = vector.multi_reduction <add>, %149, %cst_67 [1] : vector<8x8xf32> to vector<8xf32>
    %151 = vector.shape_cast %150 : vector<8xf32> to vector<8x1xf32>
    %cst_68 = arith.constant 8.000000e+00 : f32
    %cst_69 = arith.constant 1.000000e-01 : f32
    %152 = arith.mulf %cst_68, %cst_69 : f32
    %153 = vector.broadcast %152 : f32 to vector<1x1xf32>
    %154 = arith.mulf %153, %81 : vector<1x1xf32>
    %155 = arith.addf %76, %154 : vector<1x1xf32>
    %156 = vector.broadcast %155 : vector<1x1xf32> to vector<8x8xf32>
    %157 = arith.cmpf ole, %72, %156 : vector<8x8xf32>
    %158 = arith.extui %157 : vector<8x8xi1> to vector<8x8xi32>
    %159 = arith.sitofp %158 : vector<8x8xi32> to vector<8x8xf32>
    %cst_70 = arith.constant dense<0.000000e+00> : vector<8xf32>
    %160 = vector.multi_reduction <add>, %159, %cst_70 [1] : vector<8x8xf32> to vector<8xf32>
    %161 = vector.shape_cast %160 : vector<8xf32> to vector<8x1xf32>
    %cst_71 = arith.constant 9.000000e+00 : f32
    %cst_72 = arith.constant 1.000000e-01 : f32
    %162 = arith.mulf %cst_71, %cst_72 : f32
    %163 = vector.broadcast %162 : f32 to vector<1x1xf32>
    %164 = arith.mulf %163, %81 : vector<1x1xf32>
    %165 = arith.addf %76, %164 : vector<1x1xf32>
    %166 = vector.broadcast %165 : vector<1x1xf32> to vector<8x8xf32>
    %167 = arith.cmpf ole, %72, %166 : vector<8x8xf32>
    %168 = arith.extui %167 : vector<8x8xi1> to vector<8x8xi32>
    %169 = arith.sitofp %168 : vector<8x8xi32> to vector<8x8xf32>
    %cst_73 = arith.constant dense<0.000000e+00> : vector<8xf32>
    %170 = vector.multi_reduction <add>, %169, %cst_73 [1] : vector<8x8xf32> to vector<8xf32>
    %171 = vector.shape_cast %170 : vector<8xf32> to vector<8x1xf32>
    %cst_74 = arith.constant 1.000000e+01 : f32
    %cst_75 = arith.constant 1.000000e-01 : f32
    %172 = arith.mulf %cst_74, %cst_75 : f32
    %173 = vector.broadcast %172 : f32 to vector<1x1xf32>
    %174 = arith.mulf %173, %81 : vector<1x1xf32>
    %175 = arith.addf %76, %174 : vector<1x1xf32>
    %176 = vector.broadcast %175 : vector<1x1xf32> to vector<8x8xf32>
    %177 = arith.cmpf ole, %72, %176 : vector<8x8xf32>
    %178 = arith.extui %177 : vector<8x8xi1> to vector<8x8xi32>
    %179 = arith.sitofp %178 : vector<8x8xi32> to vector<8x8xf32>
    %cst_76 = arith.constant dense<0.000000e+00> : vector<8xf32>
    %180 = vector.multi_reduction <add>, %179, %cst_76 [1] : vector<8x8xf32> to vector<8xf32>
    %181 = vector.shape_cast %180 : vector<8xf32> to vector<8x1xf32>
    %182 = tpu.concatenate %91, %101, %111, %121, %131, %141, %151, %161, %171, %181 in 1 : vector<8x1xf32>, vector<8x1xf32>, vector<8x1xf32>, vector<8x1xf32>, vector<8x1xf32>, vector<8x1xf32>, vector<8x1xf32>, vector<8x1xf32>, vector<8x1xf32>, vector<8x1xf32> -> vector<8x10xf32>
    %cst_77 = arith.constant dense<0.000000e+00> : vector<10xf32>
    %183 = vector.multi_reduction <add>, %182, %cst_77 [0] : vector<8x10xf32> to vector<10xf32>
    %184 = vector.shape_cast %183 : vector<10xf32> to vector<1x10xf32>
    %cst_78 = arith.constant 5.440000e+01 : f32
    %185 = vector.broadcast %cst_78 : f32 to vector<1x10xf32>
    %186 = arith.cmpf olt, %184, %185 : vector<1x10xf32>
    %187 = arith.extui %186 : vector<1x10xi1> to vector<1x10xi32>
    %188 = arith.sitofp %187 : vector<1x10xi32> to vector<1x10xf32>
    %cst_79 = arith.constant dense<0.000000e+00> : vector<1xf32>
    %189 = vector.multi_reduction <add>, %188, %cst_79 [1] : vector<1x10xf32> to vector<1xf32>
    %190 = vector.shape_cast %189 : vector<1xf32> to vector<1x1xf32>
    %cst_80 = arith.constant 1.000000e+00 : f32
    %191 = vector.broadcast %cst_80 : f32 to vector<1x1xf32>
    %192 = arith.addf %190, %191 : vector<1x1xf32>
    %cst_81 = arith.constant 1.000000e-01 : f32
    %193 = vector.broadcast %cst_81 : f32 to vector<1x1xf32>
    %194 = arith.mulf %192, %193 : vector<1x1xf32>
    %195 = arith.mulf %194, %81 : vector<1x1xf32>
    %196 = arith.addf %76, %195 : vector<1x1xf32>
    %197 = vector.broadcast %196 : vector<1x1xf32> to vector<8x8xf32>
    %198 = arith.cmpf oge, %72, %197 : vector<8x8xf32>
    %199 = arith.extui %198 : vector<8x8xi1> to vector<8x8xi32>
    %200 = arith.sitofp %199 : vector<8x8xi32> to vector<8x8xf32>
    %c0_82 = arith.constant 0 : index
    %c0_83 = arith.constant 0 : index
    %c0_84 = arith.constant 0 : index
    %201 = vector.load %arg3[%c0_82, %c0_83, %c0_84] : memref<1x8x8xf32, #tpu.memory_space<vmem>>, vector<1x8x8xf32>
    %202 = vector.shape_cast %201 : vector<1x8x8xf32> to vector<8x8xf32>
    %203 = vector.shape_cast %200 : vector<8x8xf32> to vector<1x8x8xf32>
    tpu.vector_store %arg3[%c0_82, %c0_83, %c0_84], %203 {strides = array<i32>} : memref<1x8x8xf32, #tpu.memory_space<vmem>>, vector<1x8x8xf32>,
    %c0_85 = arith.constant 0 : index
    %c0_86 = arith.constant 0 : index
    %c0_87 = arith.constant 0 : index
    %204 = vector.load %arg4[%c0_85, %c0_86, %c0_87] : memref<1x8x8xf32, #tpu.memory_space<vmem>>, vector<1x8x8xf32>
    %205 = vector.shape_cast %204 : vector<1x8x8xf32> to vector<8x8xf32>
    %206 = vector.shape_cast %34 : vector<8x8xf32> to vector<1x8x8xf32>
    tpu.vector_store %arg4[%c0_85, %c0_86, %c0_87], %206 {strides = array<i32>} : memref<1x8x8xf32, #tpu.memory_space<vmem>>, vector<1x8x8xf32>,
    return
  }
  func.func @transform_0(%arg0: i32) -> (i32, i32, i32, i32) {
    %c0_i32 = arith.constant 0 : i32
    %c0_i32_0 = arith.constant 0 : i32
    %c0_i32_1 = arith.constant 0 : i32
    %c0_i32_2 = arith.constant 0 : i32
    return %arg0, %c0_i32, %c0_i32_0, %c0_i32_1 : i32, i32, i32, i32
  }
  func.func @transform_1(%arg0: i32) -> (i32, i32) {
    %c0_i32 = arith.constant 0 : i32
    %c0_i32_0 = arith.constant 0 : i32
    %c0_i32_1 = arith.constant 0 : i32
    return %c0_i32, %c0_i32_0 : i32, i32
  }
  func.func @transform_2(%arg0: i32) -> (i32, i32, i32) {
    %c0_i32 = arith.constant 0 : i32
    %c0_i32_0 = arith.constant 0 : i32
    %c0_i32_1 = arith.constant 0 : i32
    return %arg0, %c0_i32, %c0_i32_0 : i32, i32, i32
  }
  func.func @transform_3(%arg0: i32) -> (i32, i32, i32) {
    %c0_i32 = arith.constant 0 : i32
    %c0_i32_0 = arith.constant 0 : i32
    %c0_i32_1 = arith.constant 0 : i32
    return %arg0, %c0_i32, %c0_i32_0 : i32, i32, i32
  }
}

</mosaic_0001>

<llo_original>
// kernel: tpu_custom_call.1
$region0: #{tpu_custom_call.1}
  #allocation0 [shape = 'u32[]', space=smem, size = 0x4, offset = 0x4, fixed_abs, tag = 'smem constant byte address 0x4 - core index']
  #allocation1 [shape = 'u32[144,128]{1,0:T(1,128)}', space=vmem, size = 0x12000, scoped, tag = 'internal scratch']
  %s0 = inlined_call_operand.hbm [shape: f32[2,4,8,8], index: 0, kind: input, shape index: {}]
  %s1 = inlined_call_operand.hbm [shape: f32[4,4], index: 1, kind: input, shape index: {}]
  %s2 = inlined_call_operand.hbm [shape: f32[2,8,8], index: 2, kind: output, shape index: {0}]
  %s3 = inlined_call_operand.hbm [shape: f32[2,8,8], index: 3, kind: output, shape index: {1}]
  %4 = xla_tuple %s2, %s3
  %s5 = sld [smem:[#allocation0]]
  $region57: #{tpu_custom_call.1} parent=0
    _
  %s7 = ssub.s32 1, %s5
  %s8 = scalar_select 0, %s7, %s5
  $region1: #{tpu_custom_call.1} parent=0
    #allocation2 [shape = 'u8[32768]{0}', space=vmem, size = 0x8000, scoped, tag = 'input window, operand 0']
    #allocation3 [shape = 's32[2]{0}', space=sflag, size = 0x8, scoped, tag = 'scoped memory for tpu_custom_call.1']
    #allocation4 [shape = 's32[2]{0}', space=sflag, size = 0x8, scoped, tag = 'scoped memory for tpu_custom_call.1']
    #allocation5 [shape = 's32[2]{0}', space=sflag, size = 0x8, scoped, tag = 'scoped memory for tpu_custom_call.1']
    #allocation6 [shape = 'u8[2048]{0}', space=smem, size = 0x800, scoped, tag = 'input window, operand 1, single buffered']
    #allocation7 [shape = 'u8[8192]{0}', space=vmem, size = 0x2000, scoped, tag = 'output window, operand 0']
    #allocation8 [shape = 'u8[8192]{0}', space=vmem, size = 0x2000, scoped, tag = 'output window, operand 1']
    #allocation9 [shape = 's32[2]{0}', space=sflag, size = 0x8, scoped, tag = 'scoped memory for tpu_custom_call.1']
    %9 = vsyncpa [#allocation3], 0
    %s10 = scalar_lea.sflag [#allocation3], 1
    %11 = vsyncpa %s10, 0
    %12 = vsyncpa [#allocation5], 0
    %13 = vsyncpa [#allocation4], 0
    %s14 = scalar_lea.sflag [#allocation4], 1
    %15 = vsyncpa %s14, 0
    %16 = vsyncpa [#allocation9], 0
    %s17 = scalar_lea.sflag [#allocation9], 1
    %18 = vsyncpa %s17, 0
    loop: start=0, step=1, limit=4
    $region2: #{tpu_custom_call.1} parent=1 // loop_pre_header
      _
    $region3: #{tpu_custom_call.1} parent=1 // loop_header
      %s20 = sphi 0, %s24
      %p21 = scmp.ge.s32.totalorder %s20, 4
      %s30 = sphi 0, %s32
      %s33 = sphi 0, %s30
      %s34 = sphi 0, %s33
      %s50 = sphi 0, %s34
      %s54 = sphi 0, %s54
      %s56 = sphi 0, %s54
      %s57 = sphi 0, %s56
      %s71 = sphi 0, %s57
      %s77 = sphi 0, %s79
      %s80 = sphi 0, %s77
      %s81 = sphi 0, %s80
      %s97 = sphi 0, %s81
      %s103 = sphi 0, %s105
      %s106 = sphi 0, %s103
      %s107 = sphi 0, %s106
      %s123 = sphi 0, %s107
    $region4: #{tpu_custom_call.1} parent=1 // loop_header_branch
      %23 = sbr.rel (%p21) target = $region8
    $region5: #{tpu_custom_call.1} parent=1 // loop_body
      %s25 = ssub.s32 %s20, 1
      %s26 = ssub.s32 %s20, 2
      %s27 = sadd.s32 %s20, 1
      %s28 = ssub.s32 %s20, %s27
      %p29 = scmp.eq.s32.totalorder %s28, 0
      %s31 = sadd.s32 %s30, 1
      %s32 = scalar_select %p29, %s30, %s31
      %p35 = pneg %p29
      %p36 = scmp.eq.s32.totalorder %s20, 1
      %p37 = por %p35, %p36
      %p38 = scmp.ne.s32.totalorder %s30, %s33
      %p39 = scmp.eq.s32.totalorder %s20, 0
      %p40 = por %p38, %p39
      %p41 = scmp.ne.s32.totalorder %s30, %s33
      %p42 = scmp.eq.s32.totalorder %s25, 1
      %p43 = por %p41, %p42
      %p44 = scmp.ne.s32.totalorder %s33, %s34
      %p45 = scmp.eq.s32.totalorder %s25, 0
      %p46 = por %p44, %p45
      %p47 = scmp.ne.s32.totalorder %s33, %s34
      %p48 = scmp.eq.s32.totalorder %s26, 1
      %p49 = por %p47, %p48
      %p51 = scmp.ne.s32.totalorder %s34, %s50
      %p52 = scmp.eq.s32.totalorder %s26, 0
      %p53 = por %p51, %p52
      %s55 = sadd.s32 %s54, 1
      %p58 = scmp.eq.s32.totalorder %s20, 1
      %p59 = scmp.ne.s32.totalorder %s54, %s56
      %p60 = scmp.eq.s32.totalorder %s20, 0
      %p61 = por %p59, %p60
      %p62 = scmp.ne.s32.totalorder %s54, %s56
      %p63 = scmp.eq.s32.totalorder %s25, 1
      %p64 = por %p62, %p63
      %p65 = scmp.ne.s32.totalorder %s56, %s57
      %p66 = scmp.eq.s32.totalorder %s25, 0
      %p67 = por %p65, %p66
      %p68 = scmp.ne.s32.totalorder %s56, %s57
      %p69 = scmp.eq.s32.totalorder %s26, 1
      %p70 = por %p68, %p69
      %p72 = scmp.ne.s32.totalorder %s57, %s71
      %p73 = scmp.eq.s32.totalorder %s26, 0
      %p74 = por %p72, %p73
      %s75 = ssub.s32 %s20, %s27
      %p76 = scmp.eq.s32.totalorder %s75, 0
      %s78 = sadd.s32 %s77, 1
      %s79 = scalar_select %p76, %s77, %s78
      %p82 = pneg %p76
      %p83 = scmp.eq.s32.totalorder %s20, 1
      %p84 = por %p82, %p83
      %p85 = scmp.ne.s32.totalorder %s77, %s80
      %p86 = scmp.eq.s32.totalorder %s20, 0
      %p87 = por %p85, %p86
      %p88 = scmp.ne.s32.totalorder %s77, %s80
      %p89 = scmp.eq.s32.totalorder %s25, 1
      %p90 = por %p88, %p89
      %p91 = scmp.ne.s32.totalorder %s80, %s81
      %p92 = scmp.eq.s32.totalorder %s25, 0
      %p93 = por %p91, %p92
      %p94 = scmp.ne.s32.totalorder %s80, %s81
      %p95 = scmp.eq.s32.totalorder %s26, 1
      %p96 = por %p94, %p95
      %p98 = scmp.ne.s32.totalorder %s81, %s97
      %p99 = scmp.eq.s32.totalorder %s26, 0
      %p100 = por %p98, %p99
      %s101 = ssub.s32 %s20, %s27
      %p102 = scmp.eq.s32.totalorder %s101, 0
      %s104 = sadd.s32 %s103, 1
      %s105 = scalar_select %p102, %s103, %s104
      %p108 = pneg %p102
      %p109 = scmp.eq.s32.totalorder %s20, 1
      %p110 = por %p108, %p109
      %p111 = scmp.ne.s32.totalorder %s103, %s106
      %p112 = scmp.eq.s32.totalorder %s20, 0
      %p113 = por %p111, %p112
      %p114 = scmp.ne.s32.totalorder %s103, %s106
      %p115 = scmp.eq.s32.totalorder %s25, 1
      %p116 = por %p114, %p115
      %p117 = scmp.ne.s32.totalorder %s106, %s107
      %p118 = scmp.eq.s32.totalorder %s25, 0
      %p119 = por %p117, %p118
      %p120 = scmp.ne.s32.totalorder %s106, %s107
      %p121 = scmp.eq.s32.totalorder %s26, 1
      %p122 = por %p120, %p121
      %p124 = scmp.ne.s32.totalorder %s107, %s123
      %p125 = scmp.eq.s32.totalorder %s26, 0
      %p126 = por %p124, %p125
      %p127 = scmp.le.s32.totalorder 1, %s20
      %p128 = scmp.lt.s32.totalorder %s20, 3
      %p129 = pnand %p127, %p128
      %p130 = pneg %p129
      // Predicated region
      $region9: #{tpu_custom_call.1} parent=5 // pred_check
        _
      $region10: #{tpu_custom_call.1} parent=5 // pred_check_branch
        %132 = sbr.rel (%p129) target = $region12
      $region11: #{tpu_custom_call.1} parent=5 // pred_region
        %s133 = ssub.s32 %s20, 1
        // Predicated region
        $region13: #{tpu_custom_call.1} parent=11 // pred_check
          %p134 = pneg %p67
        $region14: #{tpu_custom_call.1} parent=11 // pred_check_branch
          %136 = sbr.rel (%p134) target = $region16
        $region15: #{tpu_custom_call.1} parent=11 // pred_region
          %s138 = ssub.s32 64, 64
          %139 = vsyncadd [#allocation5], %s138
          %142 = dma.hbm_to_smem %s1, 64, [#allocation6], [#allocation5]
        $region16: #{tpu_custom_call.1} parent=11 // pred_fallthru
          _
      $region12: #{tpu_custom_call.1} parent=5 // pred_fallthru
        _
      %p143 = scmp.lt.s32.totalorder %s20, 2
      // Predicated region
      $region17: #{tpu_custom_call.1} parent=5 // pred_check
        %p144 = pneg %p143
      $region18: #{tpu_custom_call.1} parent=5 // pred_check_branch
        %146 = sbr.rel (%p144) target = $region20
      $region19: #{tpu_custom_call.1} parent=5 // pred_region
        // Predicated region
        $region21: #{tpu_custom_call.1} parent=19 // pred_check
          %p147 = pneg %p40
        $region22: #{tpu_custom_call.1} parent=19 // pred_check_branch
          %149 = sbr.rel (%p147) target = $region24
        $region23: #{tpu_custom_call.1} parent=19 // pred_region
          %s150 = sand.u32 %s30, 1
          %s151 = scalar_lea.sflag [#allocation3], %s150
          %s152 = sand.u32 %s30, 1
          %s153 = smul.addr %s152, 32
          %s154 = scalar_lea.vmem [#allocation2], %s153
          %s156 = ssub.s32 512, 512
          %157 = vsyncadd %s151, %s156
          %s158 = smul.addr %s20, 4
          %s159 = smul.addr %s158, 128
          %s160 = scalar_lea.hbm %s0, %s159
          %s161 = sshll.u32 %s154, 4
          %s162 = int_to_ptr.vmem [resolvable:$true] %s161
          %167 = dma.hbm_to_vmem [thread:$0]  %s160, 512, %s162, %s151, 128, 128, 8
        $region24: #{tpu_custom_call.1} parent=19 // pred_fallthru
          _
      $region20: #{tpu_custom_call.1} parent=5 // pred_fallthru
        _
      %p168 = scmp.le.s32.totalorder 1, %s20
      %p169 = scmp.lt.s32.totalorder %s20, 3
      %p170 = pnand %p168, %p169
      %p171 = pneg %p170
      // Predicated region
      $region25: #{tpu_custom_call.1} parent=5 // pred_check
        _
      $region26: #{tpu_custom_call.1} parent=5 // pred_check_branch
        %173 = sbr.rel (%p170) target = $region28
      $region27: #{tpu_custom_call.1} parent=5 // pred_region
        %s174 = ssub.s32 %s20, 1
        %s175 = sand.u32 %s33, 1
        %s176 = scalar_lea.sflag [#allocation3], %s175
        %s177 = sand.u32 %s33, 1
        %s178 = smul.addr %s177, 32
        %s179 = scalar_lea.vmem [#allocation2], %s178
        // Predicated region
        $region29: #{tpu_custom_call.1} parent=27 // pred_check
          %p180 = pneg %p46
        $region30: #{tpu_custom_call.1} parent=27 // pred_check_branch
          %182 = sbr.rel (%p180) target = $region32
        $region31: #{tpu_custom_call.1} parent=27 // pred_region
          %183 = dma.done %s176, 512
        $region32: #{tpu_custom_call.1} parent=27 // pred_fallthru
          _
        // Predicated region
        $region33: #{tpu_custom_call.1} parent=27 // pred_check
          %p184 = pneg %p67
        $region34: #{tpu_custom_call.1} parent=27 // pred_check_branch
          %186 = sbr.rel (%p184) target = $region36
        $region35: #{tpu_custom_call.1} parent=27 // pred_region
          %187 = dma.done [#allocation5], 64
        $region36: #{tpu_custom_call.1} parent=27 // pred_fallthru
          _
        %188 = sfence
        %s189 = sand.u32 %s33, 1
        %s190 = scalar_lea.sflag [#allocation3], %s189
        %s191 = sand.u32 %s33, 1
        %s192 = smul.addr %s191, 32
        %s193 = scalar_lea.vmem [#allocation2], %s192
        %p194 = pneg %p46
        %p195 = pneg %p43
        %p196 = pneg %p67
        %p197 = pneg %p64
        %p198 = pneg %p93
        %p199 = pneg %p90
        %s200 = sand.u32 %s80, 1
        %s201 = scalar_lea.sflag [#allocation4], %s200
        %s202 = sand.u32 %s80, 1
        %s203 = smul.addr %s202, 8
        %s204 = scalar_lea.vmem [#allocation7], %s203
        %p205 = pneg %p119
        %p206 = pneg %p116
        %s207 = sand.u32 %s106, 1
        %s208 = scalar_lea.sflag [#allocation9], %s207
        %s209 = sand.u32 %s106, 1
        %s210 = smul.addr %s209, 8
        %s211 = scalar_lea.vmem [#allocation8], %s210
        %v212 = vld [vmem:[%s179] sm:$0xff]
        %s213 = scalar_lea.vmem %s179, 8 [#allocation2]
        %v214 = vld [vmem:[%s213] sm:$0xff]
        %s215 = scalar_lea.vmem %s179, 16 [#allocation2]
        %v216 = vld [vmem:[%s215] sm:$0xff]
        %s217 = scalar_lea.vmem %s179, 24 [#allocation2]
        %v218 = vld [vmem:[%s217] sm:$0xff]
        %s219 = sld [smem:[#allocation6]]
        %s220 = sld [smem:[#allocation6 + $0x1]]
        %s221 = sld [smem:[#allocation6 + $0x2]]
        %s222 = sld [smem:[#allocation6 + $0x3]]
        %s223 = sld [smem:[#allocation6 + $0x80]]
        %s224 = sld [smem:[#allocation6 + $0x81]]
        %s225 = sld [smem:[#allocation6 + $0x82]]
        %s226 = sld [smem:[#allocation6 + $0x83]]
        %s227 = sld [smem:[#allocation6 + $0x100]]
        %s228 = sld [smem:[#allocation6 + $0x101]]
        %s229 = sld [smem:[#allocation6 + $0x102]]
        %s230 = sld [smem:[#allocation6 + $0x103]]
        %s231 = sld [smem:[#allocation6 + $0x180]]
        %s232 = sld [smem:[#allocation6 + $0x181]]
        %s233 = sld [smem:[#allocation6 + $0x182]]
        %s234 = sld [smem:[#allocation6 + $0x183]]
        %v235 = vstv %s219
        %v236 = vmul.f32 %v235, %v212
        %v237 = vstv %s220
        %v238 = vmul.f32 %v237, %v214
        %v239 = vadd.f32 %v236, %v238
        %v240 = vstv %s221
        %v241 = vmul.f32 %v240, %v216
        %v242 = vadd.f32 %v239, %v241
        %v243 = vstv %s222
        %v244 = vmul.f32 %v243, %v218
        %v245 = vadd.f32 %v242, %v244
        %v246 = vstv %s223
        %v247 = vmul.f32 %v246, %v212
        %v248 = vstv %s224
        %v249 = vmul.f32 %v248, %v214
        %v250 = vadd.f32 %v247, %v249
        %v251 = vstv %s225
        %v252 = vmul.f32 %v251, %v216
        %v253 = vadd.f32 %v250, %v252
        %v254 = vstv %s226
        %v255 = vmul.f32 %v254, %v218
        %v256 = vadd.f32 %v253, %v255
        %v257 = vand.u32 2147483647, %v256
        %v258 = vstv %s227
        %v259 = vmul.f32 %v258, %v212
        %v260 = vstv %s228
        %v261 = vmul.f32 %v260, %v214
        %v262 = vadd.f32 %v259, %v261
        %v263 = vstv %s229
        %v264 = vmul.f32 %v263, %v216
        %v265 = vadd.f32 %v262, %v264
        %v266 = vstv %s230
        %v267 = vmul.f32 %v266, %v218
        %v268 = vadd.f32 %v265, %v267
        %v269 = vand.u32 2147483647, %v268
        %v270 = vmax.f32 %v257, %v269
        %v271 = vstv %s231
        %v272 = vmul.f32 %v271, %v212
        %v273 = vstv %s232
        %v274 = vmul.f32 %v273, %v214
        %v275 = vadd.f32 %v272, %v274
        %v276 = vstv %s233
        %v277 = vmul.f32 %v276, %v216
        %v278 = vadd.f32 %v275, %v277
        %v279 = vstv %s234
        %v280 = vmul.f32 %v279, %v218
        %v281 = vadd.f32 %v278, %v280
        %v282 = vand.u32 2147483647, %v281
        %v283 = vmax.f32 %v270, %v282
        %vm284 = vcmask 64512
        %v285 = vsel %vm284, %v283, inf
        %286 = vmin.xlane.f32.xlu0 %v285
        %v287 = vpop.xlane.xlu0 %286
        %v288 = vrot.slane %v287, 4
        %v289 = vmin.f32 %v287, %v288
        %v290 = vrot.slane %v289, 2
        %v291 = vmin.f32 %v289, %v290
        %v292 = vrot.slane %v291, 1
        %v293 = vmin.f32 %v291, %v292
        %v294 = vsel %vm284, %v283, -inf
        %295 = vmax.xlane.f32.xlu0 %v294
        %v296 = vpop.xlane.xlu0 %295
        %v297 = vrot.slane %v296, 4
        %v298 = vmax.f32 %v296, %v297
        %v299 = vrot.slane %v298, 2
        %v300 = vmax.f32 %v298, %v299
        %v301 = vrot.slane %v300, 1
        %v302 = vmax.f32 %v300, %v301
        %v303 = vsub.f32 %v302, %v293
        %v304 = vmul.f32 %v303, 0.1
        %v305 = vadd.f32 %v293, %v304
        %vm306 = vcmp.le.f32.partialorder %v283, %v305
        %v307 = vsel %vm306, 1, 0
        %v308 = vcvt.s32.f32 %v307
        %v309 = vsel %vm284, %v308, 0.0
        %310 = vadd.xlane.f32.xlu0 %v309
        %v311 = vpop.xlane.xlu0 %310
        %v312 = vmul.f32 %v303, 0.2
        %v313 = vadd.f32 %v293, %v312
        %vm314 = vcmp.le.f32.partialorder %v283, %v313
        %v315 = vsel %vm314, 1, 0
        %v316 = vcvt.s32.f32 %v315
        %v317 = vsel %vm284, %v316, 0.0
        %318 = vadd.xlane.f32.xlu0 %v317
        %v319 = vpop.xlane.xlu0 %318
        %v320 = vmul.f32 %v303, 0.3
        %v321 = vadd.f32 %v293, %v320
        %vm322 = vcmp.le.f32.partialorder %v283, %v321
        %v323 = vsel %vm322, 1, 0
        %v324 = vcvt.s32.f32 %v323
        %v325 = vsel %vm284, %v324, 0.0
        %326 = vadd.xlane.f32.xlu0 %v325
        %v327 = vpop.xlane.xlu0 %326
        %v328 = vmul.f32 %v303, 0.4
        %v329 = vadd.f32 %v293, %v328
        %vm330 = vcmp.le.f32.partialorder %v283, %v329
        %v331 = vsel %vm330, 1, 0
        %v332 = vcvt.s32.f32 %v331
        %v333 = vsel %vm284, %v332, 0.0
        %334 = vadd.xlane.f32.xlu0 %v333
        %v335 = vpop.xlane.xlu0 %334
        %v336 = vmul.f32 %v303, 0.5
        %v337 = vadd.f32 %v293, %v336
        %vm338 = vcmp.le.f32.partialorder %v283, %v337
        %v339 = vsel %vm338, 1, 0
        %v340 = vcvt.s32.f32 %v339
        %v341 = vsel %vm284, %v340, 0.0
        %342 = vadd.xlane.f32.xlu0 %v341
        %v343 = vpop.xlane.xlu0 %342
        %v344 = vmul.f32 %v303, 0.6
        %v345 = vadd.f32 %v293, %v344
        %vm346 = vcmp.le.f32.partialorder %v283, %v345
        %v347 = vsel %vm346, 1, 0
        %v348 = vcvt.s32.f32 %v347
        %v349 = vsel %vm284, %v348, 0.0
        %350 = vadd.xlane.f32.xlu0 %v349
        %v351 = vpop.xlane.xlu0 %350
        %v352 = vmul.f32 %v303, 0.7
        %v353 = vadd.f32 %v293, %v352
        %vm354 = vcmp.le.f32.partialorder %v283, %v353
        %v355 = vsel %vm354, 1, 0
        %v356 = vcvt.s32.f32 %v355
        %v357 = vsel %vm284, %v356, 0.0
        %358 = vadd.xlane.f32.xlu0 %v357
        %v359 = vpop.xlane.xlu0 %358
        %v360 = vmul.f32 %v303, 0.8
        %v361 = vadd.f32 %v293, %v360
        %vm362 = vcmp.le.f32.partialorder %v283, %v361
        %v363 = vsel %vm362, 1, 0
        %v364 = vcvt.s32.f32 %v363
        %v365 = vsel %vm284, %v364, 0.0
        %366 = vadd.xlane.f32.xlu0 %v365
        %v367 = vpop.xlane.xlu0 %366
        %v368 = vmul.f32 %v303, 0.90000004
        %v369 = vadd.f32 %v293, %v368
        %vm370 = vcmp.le.f32.partialorder %v283, %v369
        %v371 = vsel %vm370, 1, 0
        %v372 = vcvt.s32.f32 %v371
        %v373 = vsel %vm284, %v372, 0.0
        %374 = vadd.xlane.f32.xlu0 %v373
        %v375 = vpop.xlane.xlu0 %374
        %v376 = vadd.f32 %v293, %v303
        %vm377 = vcmp.le.f32.partialorder %v283, %v376
        %v378 = vsel %vm377, 1, 0
        %v379 = vcvt.s32.f32 %v378
        %v380 = vsel %vm284, %v379, 0.0
        %381 = vadd.xlane.f32.xlu0 %v380
        %v382 = vpop.xlane.xlu0 %381
        %vm383 = vcmask 7168
        %v384 = vsel %vm383, %v311, %v319
        %vm385 = vcmask 15360
        %v386 = vsel %vm385, %v384, %v327
        %vm387 = vcmask 23552
        %v388 = vsel %vm387, %v386, %v335
        %vm389 = vcmask 31744
        %v390 = vsel %vm389, %v388, %v343
        %vm391 = vcmask 39936
        %v392 = vsel %vm391, %v390, %v351
        %vm393 = vcmask 48128
        %v394 = vsel %vm393, %v392, %v359
        %vm395 = vcmask 56320
        %v396 = vsel %vm395, %v394, %v367
        %v397 = vsel %vm284, %v396, %v375
        %vm398 = vcmask 72704
        %v399 = vsel %vm398, %v397, %v382
        %vm400 = vcmask 80896
        %v401 = vsel %vm400, %v399, 0.0
        %v402 = vrot.slane %v401, 4
        %v403 = vadd.f32 %v401, %v402
        %v404 = vrot.slane %v403, 2
        %v405 = vadd.f32 %v403, %v404
        %v406 = vrot.slane %v405, 1
        %v407 = vadd.f32 %v405, %v406
        %vm408 = vcmp.lt.f32.partialorder %v407, 54.4
        %v409 = vsel %vm408, 1, 0
        %v410 = vcvt.s32.f32 %v409
        %v411 = vsel %vm400, %v410, 0.0
        %412 = vadd.xlane.f32.xlu0 %v411
        %v413 = vpop.xlane.xlu0 %412
        %v414 = vadd.f32 %v413, 1.0
        %v415 = vmul.f32 %v414, 0.1
        %v416 = vmul.f32 %v415, %v303
        %v417 = vadd.f32 %v293, %v416
        %vm418 = vcmp.ge.f32.partialorder %v283, %v417
        %v419 = vsel %vm418, 1, 0
        %v420 = vcvt.s32.f32 %v419
        %421 = vst.msk [vmem:[%s204] sm:$0xff] %vm284, %v420
        %422 = vst.msk [vmem:[%s211] sm:$0xff] %vm284, %v245
        %s423 = sand.u32 %s80, 1
        %s424 = scalar_lea.sflag [#allocation4], %s423
        %s425 = sand.u32 %s80, 1
        %s426 = smul.addr %s425, 8
        %s427 = scalar_lea.vmem [#allocation7], %s426
        %s428 = sand.u32 %s106, 1
        %s429 = scalar_lea.sflag [#allocation9], %s428
        %s430 = sand.u32 %s106, 1
        %s431 = smul.addr %s430, 8
        %s432 = scalar_lea.vmem [#allocation8], %s431
        // Predicated region
        $region37: #{tpu_custom_call.1} parent=27 // pred_check
          %p433 = pneg %p90
        $region38: #{tpu_custom_call.1} parent=27 // pred_check_branch
          %435 = sbr.rel (%p433) target = $region40
        $region39: #{tpu_custom_call.1} parent=27 // pred_region
          %s437 = ssub.s32 128, 128
          %438 = vsyncadd %s424, %s437
          %s439 = smul.addr %s25, 128
          %s440 = scalar_lea.hbm %s2, %s439
          %s442 = sshll.u32 %s427, 4
          %s443 = int_to_ptr.vmem [resolvable:$true] %s442
          %445 = dma.vmem_to_hbm [thread:$0]  %s443, 128, %s440, %s424
        $region40: #{tpu_custom_call.1} parent=27 // pred_fallthru
          _
        // Predicated region
        $region41: #{tpu_custom_call.1} parent=27 // pred_check
          %p446 = pneg %p116
        $region42: #{tpu_custom_call.1} parent=27 // pred_check_branch
          %448 = sbr.rel (%p446) target = $region44
        $region43: #{tpu_custom_call.1} parent=27 // pred_region
          %s450 = ssub.s32 128, 128
          %451 = vsyncadd %s429, %s450
          %s452 = smul.addr %s25, 128
          %s453 = scalar_lea.hbm %s3, %s452
          %s455 = sshll.u32 %s432, 4
          %s456 = int_to_ptr.vmem [resolvable:$true] %s455
          %458 = dma.vmem_to_hbm [thread:$0]  %s456, 128, %s453, %s429
        $region44: #{tpu_custom_call.1} parent=27 // pred_fallthru
          _
      $region28: #{tpu_custom_call.1} parent=5 // pred_fallthru
        _
      %p459 = scmp.le.s32.totalorder 2, %s20
      // Predicated region
      $region45: #{tpu_custom_call.1} parent=5 // pred_check
        %p460 = pneg %p459
      $region46: #{tpu_custom_call.1} parent=5 // pred_check_branch
        %462 = sbr.rel (%p460) target = $region48
      $region47: #{tpu_custom_call.1} parent=5 // pred_region
        %s463 = ssub.s32 %s20, 2
        // Predicated region
        $region49: #{tpu_custom_call.1} parent=47 // pred_check
          %p464 = pneg %p96
        $region50: #{tpu_custom_call.1} parent=47 // pred_check_branch
          %466 = sbr.rel (%p464) target = $region52
        $region51: #{tpu_custom_call.1} parent=47 // pred_region
          %s467 = sand.u32 %s81, 1
          %s468 = scalar_lea.sflag [#allocation4], %s467
          %s469 = sand.u32 %s81, 1
          %s470 = smul.addr %s469, 8
          %s471 = scalar_lea.vmem [#allocation7], %s470
          %472 = dma.done %s468, 128
        $region52: #{tpu_custom_call.1} parent=47 // pred_fallthru
          _
        // Predicated region
        $region53: #{tpu_custom_call.1} parent=47 // pred_check
          %p473 = pneg %p122
        $region54: #{tpu_custom_call.1} parent=47 // pred_check_branch
          %475 = sbr.rel (%p473) target = $region56
        $region55: #{tpu_custom_call.1} parent=47 // pred_region
          %s476 = sand.u32 %s107, 1
          %s477 = scalar_lea.sflag [#allocation9], %s476
          %s478 = sand.u32 %s107, 1
          %s479 = smul.addr %s478, 8
          %s480 = scalar_lea.vmem [#allocation8], %s479
          %481 = dma.done %s477, 128
        $region56: #{tpu_custom_call.1} parent=47 // pred_fallthru
          _
      $region48: #{tpu_custom_call.1} parent=5 // pred_fallthru
        _
    $region6: #{tpu_custom_call.1} parent=1 // loop_footer
      %s24 = sadd.s32 1, %s20
    $region7: #{tpu_custom_call.1} parent=1 // loop_footer_branch
      %19 = sbr.rel target = $region3
    $region8: #{tpu_custom_call.1} parent=1 // loop_exit
      _
    %482 = vsyncpa [#allocation3], 1
    %s483 = scalar_lea.sflag [#allocation3], 1
    %484 = vsyncpa %s483, 1
    %485 = vsyncpa [#allocation4], 1
    %s486 = scalar_lea.sflag [#allocation4], 1
    %487 = vsyncpa %s486, 1
    %488 = vsyncpa [#allocation9], 1
    %s489 = scalar_lea.sflag [#allocation9], 1
    %490 = vsyncpa %s489, 1
    %491 = vsyncpa [#allocation5], 1
    %s492 = scalar_lea.sflag [#allocation5], 1
    %493 = vsyncpa %s492, 1

</llo_original>
